<compile_context>
chip_gen: v5e
topology: v5e:2x2
jax: 0.10.0
libtpu: 0.0.40
codegen_flags: <defaults>
</compile_context>

<pallas_src>
import math
import jax
import jax.numpy as jnp
from jax import lax
from jax.experimental import pallas as pl
from jax.experimental.pallas import tpu as pltpu


# ---------------------------------------------------------------------------
# chip / tile helpers
# ---------------------------------------------------------------------------

def _sublane_align(dtype):
    """Sublane alignment per dtype: 8 for 4-byte, 16 for bf16, 32 for int8."""
    itemsize = jnp.dtype(dtype).itemsize
    return max(8, 32 // max(1, itemsize))


def _pick_tile(dim, target, align):
    """Largest multiple of `align` that divides `dim` and is <= target.
    Falls back to the full dim (a full-extent block is always legal)."""
    if dim <= target:
        return dim
    t = (min(target, dim) // align) * align
    while t >= align:
        if dim % t == 0:
            return t
        t -= align
    return dim


def _pick_head_group(num_heads, head_dim):
    """Smallest G dividing num_heads with G*head_dim % 128 == 0 (lane-dense
    blocks). Fallback: all heads."""
    for g in range(1, num_heads + 1):
        if num_heads % g == 0 and (g * head_dim) % 128 == 0:
            return g
    return num_heads


def _chip_config():
    """Per-generation tiling / scoped-VMEM targets.

    v5e / v6e (128 MiB VMEM): big tiles + ~96 MiB scoped VMEM -> close to HBM
    roofline on the mem-bound projections.
    v7x (64 MiB VMEM) or unknown: conservative 48 MiB / smaller tiles so
    double-buffering stays intact.
    """
    vmem_cap = None
    try:
        info = pltpu.get_tpu_info()
        vmem_cap = getattr(info, "vmem_capacity_bytes", None)
    except Exception:
        vmem_cap = None
    if vmem_cap is not None and vmem_cap >= 100 * 1024 * 1024:
        return dict(vmem_limit=96 * 1024 * 1024, tm=512, tn=512, tk=1024, tq=512)
    return dict(vmem_limit=48 * 1024 * 1024, tm=256, tn=256, tk=512, tq=256)


# ---------------------------------------------------------------------------
# generic tiled linear:  y = x @ w_t + b   (used for fused QKV and out_proj)
# ---------------------------------------------------------------------------

def _linear_kernel(x_ref, w_ref, b_ref, o_ref, acc_ref):
    @pl.when(pl.program_id(2) == 0)
    def _init():
        acc_ref[...] = jnp.zeros_like(acc_ref)

    acc_ref[...] += jnp.dot(x_ref[...], w_ref[...],
                            preferred_element_type=jnp.float32)

    @pl.when(pl.program_id(2) == pl.num_programs(2) - 1)
    def _finalize():
        o_ref[...] = (acc_ref[...] + b_ref[...]).astype(o_ref.dtype)


def linear(x, w_t, b, cfg, *, tn_target=None):
    """x: (M, K); w_t: (K, N) (= W.T of nn.Linear); b: (1, N) -> (M, N)."""
    M, K = x.shape
    N = w_t.shape[1]
    align = _sublane_align(x.dtype)
    tm = _pick_tile(M, cfg["tm"], align)
    tn = _pick_tile(N, tn_target if tn_target is not None else cfg["tn"], 128)
    tk = _pick_tile(K, cfg["tk"], 128)
    cost = pl.CostEstimate(
        flops=int(2 * M * K * N),
        transcendentals=0,
        bytes_accessed=int((M * K + K * N + N + M * N) * x.dtype.itemsize),
    )
    # TODO(synk): on v5e, consider pipeline_mode=pl.Buffered(3) on the weight
    # BlockSpec if the weight DMA is exposed at small M.
    return pl.pallas_call(
        _linear_kernel,
        out_shape=jax.ShapeDtypeStruct((M, N), x.dtype),
        grid=(M // tm, N // tn, K // tk),
        in_specs=[
            pl.BlockSpec((tm, tk), lambda i, j, k: (i, k)),
            pl.BlockSpec((tk, tn), lambda i, j, k: (k, j)),
            pl.BlockSpec((1, tn), lambda i, j, k: (0, j)),
        ],
        out_specs=pl.BlockSpec((tm, tn), lambda i, j, k: (i, j)),
        scratch_shapes=[pltpu.VMEM((tm, tn), jnp.float32)],
        compiler_params=pltpu.CompilerParams(
            dimension_semantics=("parallel", "parallel", "arbitrary"),
            vmem_limit_bytes=cfg["vmem_limit"],
        ),
        cost_estimate=cost,
    )(x, w_t, b)


# ---------------------------------------------------------------------------
# attention: softmax(q k^T) v  (scale already folded into the Q projection)
# reads head-group column blocks straight from the (B, T, 3E) qkv slab and
# writes a merged-head (B, T, E) slab; query axis is tiled.
# ---------------------------------------------------------------------------

def _make_attn_kernel(g_heads, head_dim, q_off, k_off, v_off):
    def kernel(q_ref, k_ref, v_ref, o_ref):
        outs = []
        for g in range(g_heads):
            lo = g * head_dim
            q = q_ref[0, :, q_off + lo:q_off + lo + head_dim]      # (tq, Dh)
            k = k_ref[0, :, k_off + lo:k_off + lo + head_dim]      # (S,  Dh)
            v = v_ref[0, :, v_off + lo:v_off + lo + head_dim]      # (S,  Dh)
            # q @ k^T without materializing a transpose (contract last dims).
            s = lax.dot_general(q, k, (((1,), (1,)), ((), ())),
                                preferred_element_type=jnp.float32)  # (tq, S)
            s = s - jnp.max(s, axis=-1, keepdims=True)
            # TODO(synk): for bf16 inputs on v6e/v7x, exp in bf16 (EUP ~2x)
            # with the row-sum kept in fp32.
            e = jnp.exp(s)
            l = jnp.sum(e, axis=-1, keepdims=True)
            pv = jnp.dot(e.astype(v.dtype), v,
                         preferred_element_type=jnp.float32)         # (tq, Dh)
            # fold 1/l into the PV result; approx reciprocal runs on the EUP slot
            outs.append(pv * pl.reciprocal(l, approx=True))
        merged = outs[0] if len(outs) == 1 else jnp.concatenate(outs, axis=-1)
        o_ref[0] = merged.astype(o_ref.dtype)   # one lane-dense (tq, GD) store
    return kernel


def attention_from_qkv(qkv, batch, seq, num_heads, head_dim, cfg):
    """qkv: (B*T, 3E) slab laid out [q_h0|q_h1|...|k_h0|...|v_h0|...].
    Returns merged-head attention output (B*T, E)."""
    E = num_heads * head_dim
    dtype = qkv.dtype
    qkv3 = qkv.reshape(batch, seq, 3 * E)      # free (row-major metadata only)

    align = _sublane_align(dtype)
    tq = _pick_tile(seq, cfg["tq"], align)
    nq = seq // tq

    G = _pick_head_group(num_heads, head_dim)
    GD = G * head_dim
    NG = num_heads // G

    if GD % 128 == 0:
        # lane-dense head-group column blocks straight out of the slab
        q_spec = pl.BlockSpec((1, tq, GD), lambda b, hg, qi: (b, qi, hg))
        k_spec = pl.BlockSpec((1, seq, GD), lambda b, hg, qi: (b, 0, NG + hg))
        v_spec = pl.BlockSpec((1, seq, GD), lambda b, hg, qi: (b, 0, 2 * NG + hg))
        kernel = _make_attn_kernel(G, head_dim, 0, 0, 0)
    else:
        # small-E fallback: full-width (3E) blocks (full last dim is always a
        # legal block shape); q/k/v column regions sliced inside the kernel.
        G, GD, NG = num_heads, E, 1
        q_spec = pl.BlockSpec((1, tq, 3 * E), lambda b, hg, qi: (b, qi, 0))
        k_spec = pl.BlockSpec((1, seq, 3 * E), lambda b, hg, qi: (b, 0, 0))
        v_spec = pl.BlockSpec((1, seq, 3 * E), lambda b, hg, qi: (b, 0, 0))
        kernel = _make_attn_kernel(num_heads, head_dim, 0, E, 2 * E)

    BT = batch * seq
    cost = pl.CostEstimate(
        flops=int(4 * batch * num_heads * seq * seq * head_dim),
        transcendentals=int(batch * num_heads * seq * seq),
        bytes_accessed=int(4 * BT * E * dtype.itemsize),
    )
    # TODO(synk): for very long sequences, replace the full-S KV blocks with a
    # flash-style online-softmax KV loop (m/l/acc scratch) to bound VMEM.
    out = pl.pallas_call(
        kernel,
        out_shape=jax.ShapeDtypeStruct((batch, seq, E), dtype),
        grid=(batch, NG, nq),
        in_specs=[q_spec, k_spec, v_spec],
        out_specs=pl.BlockSpec((1, tq, GD), lambda b, hg, qi: (b, qi, hg)),
        compiler_params=pltpu.CompilerParams(
            dimension_semantics=("parallel", "parallel", "parallel"),
            vmem_limit_bytes=cfg["vmem_limit"],
        ),
        cost_estimate=cost,
    )(qkv3, qkv3, qkv3)
    return out.reshape(BT, E)


# ---------------------------------------------------------------------------
# BartAttention forward (self-attention path)
# ---------------------------------------------------------------------------

def bart_attention_forward(hidden_states, params, num_heads):
    """hidden_states: (B, T, E). Returns (attn_output, None, None), matching
    the PyTorch module in eval mode with no cache / mask / output_attentions."""
    B, T, E = hidden_states.shape
    assert E % num_heads == 0
    head_dim = E // num_heads
    scaling = head_dim ** (-0.5)
    cfg = _chip_config()

    x2d = hidden_states.reshape(B * T, E)

    # one-time parameter packing (nn.Linear: y = x @ W.T + b); the softmax
    # scale is folded into the fp32 Q weights/bias (no per-token multiply).
    w_qkv = jnp.concatenate(
        [params["q_w"].T * scaling, params["k_w"].T, params["v_w"].T], axis=1)  # (E, 3E)
    b_qkv = jnp.concatenate(
        [params["q_b"] * scaling, params["k_b"], params["v_b"]])[None, :]       # (1, 3E)

    # fused Q/K/V projection: one wide matmul -> (B*T, 3E) slab; columns are
    # already per-head ordered so the head split is a BlockSpec column offset.
    qkv = linear(x2d, w_qkv, b_qkv, cfg, tn_target=3 * cfg["tn"])

    # softmax(Q K^T) V, output written directly in merged-head layout.
    attn = attention_from_qkv(qkv, B, T, num_heads, head_dim, cfg)   # (B*T, E)

    # TODO(synk): optionally fuse out_proj into the attention call (head-group
    # reduction grid axis) to skip the merged-head HBM round-trip.
    out = linear(attn, params["o_w"].T, params["o_b"][None, :], cfg)
    out = out.reshape(B, T, E)
    # TODO(synk): cross-attention / past_key_value / attention_mask /
    # layer_head_mask / dropout / output_attentions branches not exercised here.
    return out, None, None


# ---------------------------------------------------------------------------
# Pure-JAX reference (correctness sanity check)
# ---------------------------------------------------------------------------

def bart_attention_ref(hidden_states, params, num_heads):
    B, T, E = hidden_states.shape
    head_dim = E // num_heads
    scaling = head_dim ** (-0.5)
    lin = lambda x, w, b: x @ w.T + b
    q = lin(hidden_states, params["q_w"], params["q_b"]) * scaling
    k = lin(hidden_states, params["k_w"], params["k_b"])
    v = lin(hidden_states, params["v_w"], params["v_b"])
    sh = lambda t: t.reshape(B, T, num_heads, head_dim).transpose(0, 2, 1, 3)
    qh, kh, vh = sh(q), sh(k), sh(v)
    w = jnp.einsum("bhtd,bhsd->bhts", qh, kh)
    w = jax.nn.softmax(w, axis=-1)
    o = jnp.einsum("bhts,bhsd->bhtd", w, vh)
    o = o.transpose(0, 2, 1, 3).reshape(B, T, E)
    return lin(o, params["o_w"], params["o_b"])


# ---------------------------------------------------------------------------

if __name__ == "__main__":
    def run_case(B, T, E, H, seed):
        key = jax.random.PRNGKey(seed)
        keys = jax.random.split(key, 9)

        def init_w(k):
            # nn.Linear weight shape: (out_features, in_features)
            return jax.random.normal(k, (E, E), jnp.float32) * (1.0 / math.sqrt(E))

        def init_b(k):
            return jax.random.normal(k, (E,), jnp.float32) * 0.01

        params = {
            "q_w": init_w(keys[0]), "q_b": init_b(keys[1]),
            "k_w": init_w(keys[2]), "k_b": init_b(keys[3]),
            "v_w": init_w(keys[4]), "v_b": init_b(keys[5]),
            "o_w": init_w(keys[6]), "o_b": init_b(keys[7]),
        }
        hidden_states = jax.random.normal(keys[8], (B, T, E), jnp.float32)

        out, attn_w, past_kv = bart_attention_forward(hidden_states, params, H)
        out = jax.block_until_ready(out)

        ref = bart_attention_ref(hidden_states, params, H)
        assert out.shape == (B, T, E)
        # approx=True reciprocal on the softmax denominator -> slightly looser tol
        assert jnp.allclose(out, ref, atol=5e-3, rtol=5e-3), (
            f"mismatch vs reference for B={B}, T={T}, E={E}, H={H}")

    # primary small case (matches the module spec sizes): small-E fallback path
    run_case(B=2, T=8, E=32, H=4, seed=0)
    # lane-dense head-group path (G*Dh = 128) with query-axis tiling exercised
    run_case(B=1, T=1024, E=128, H=2, seed=0)

    print("KERNEL_OK")
</pallas_src>

<mosaic_0001>
module attributes {stable_mosaic.version = 11 : i64} {
  func.func @_linear_kernel(%arg0: i32, %arg1: i32, %arg2: i32, %arg3: memref<16x32xf32, #tpu.memory_space<vmem>>, %arg4: memref<32x96xf32, #tpu.memory_space<vmem>>, %arg5: memref<1x96xf32, #tpu.memory_space<vmem>>, %arg6: memref<16x96xf32, #tpu.memory_space<vmem>>, %arg7: memref<16x96xf32, #tpu.memory_space<vmem>>) attributes {dimension_semantics = [#tpu.dimension_semantics<parallel>, #tpu.dimension_semantics<parallel>, #tpu.dimension_semantics<arbitrary>], iteration_bounds = array<i64: 1, 1, 1>, scalar_prefetch = 0 : i64, scratch_operands = 1 : i64, tpu.core_type = #tpu.core_type<tc>, window_params = [{transform_indices = @transform_0, window_bounds = array<i64: 16, 32>}, {transform_indices = @transform_1, window_bounds = array<i64: 32, 96>}, {transform_indices = @transform_2, window_bounds = array<i64: 1, 96>}, {transform_indices = @transform_3, window_bounds = array<i64: 16, 96>}]} {
    %c0_i32 = arith.constant 0 : i32
    %0 = arith.cmpi eq, %arg2, %c0_i32 : i32
    %1 = arith.extui %0 : i1 to i32
    %c0_i32_0 = arith.constant 0 : i32
    %2 = arith.cmpi ne, %1, %c0_i32_0 : i32
    scf.if %2 {
      %cst_10 = arith.constant 0.000000e+00 : f32
      %12 = vector.broadcast %cst_10 : f32 to vector<16x96xf32>
      %c0_11 = arith.constant 0 : index
      %c0_12 = arith.constant 0 : index
      %13 = vector.load %arg7[%c0_11, %c0_12] : memref<16x96xf32, #tpu.memory_space<vmem>>, vector<16x96xf32>
      tpu.vector_store %arg7[%c0_11, %c0_12], %12 {strides = array<i32>} : memref<16x96xf32, #tpu.memory_space<vmem>>, vector<16x96xf32>,
    } else {
    }
    %c0 = arith.constant 0 : index
    %c0_1 = arith.constant 0 : index
    %3 = vector.load %arg7[%c0, %c0_1] : memref<16x96xf32, #tpu.memory_space<vmem>>, vector<16x96xf32>
    %c0_2 = arith.constant 0 : index
    %c0_3 = arith.constant 0 : index
    %4 = vector.load %arg3[%c0_2, %c0_3] : memref<16x32xf32, #tpu.memory_space<vmem>>, vector<16x32xf32>
    %c0_4 = arith.constant 0 : index
    %c0_5 = arith.constant 0 : index
    %5 = vector.load %arg4[%c0_4, %c0_5] : memref<32x96xf32, #tpu.memory_space<vmem>>, vector<32x96xf32>
    %cst = arith.constant dense<0.000000e+00> : vector<16x96xf32>
    %6 = tpu.matmul %4, %5, %cst {dimension_numbers = #tpu.dot_dimension_numbers<[1], [0], [0], [1], [0, 0, 1, 1], [], []>} : vector<16x32xf32>, vector<32x96xf32>, vector<16x96xf32> -> vector<16x96xf32>
    %7 = arith.addf %3, %6 : vector<16x96xf32>
    %c0_6 = arith.constant 0 : index
    %c0_7 = arith.constant 0 : index
    %8 = vector.load %arg7[%c0_6, %c0_7] : memref<16x96xf32, #tpu.memory_space<vmem>>, vector<16x96xf32>
    tpu.vector_store %arg7[%c0_6, %c0_7], %7 {strides = array<i32>} : memref<16x96xf32, #tpu.memory_space<vmem>>, vector<16x96xf32>,
    %c0_i32_8 = arith.constant 0 : i32
    %9 = arith.cmpi eq, %arg2, %c0_i32_8 : i32
    %10 = arith.extui %9 : i1 to i32
    %c0_i32_9 = arith.constant 0 : i32
    %11 = arith.cmpi ne, %10, %c0_i32_9 : i32
    scf.if %11 {
      %c0_10 = arith.constant 0 : index
      %c0_11 = arith.constant 0 : index
      %12 = vector.load %arg7[%c0_10, %c0_11] : memref<16x96xf32, #tpu.memory_space<vmem>>, vector<16x96xf32>
      %c0_12 = arith.constant 0 : index
      %c0_13 = arith.constant 0 : index
      %13 = vector.load %arg5[%c0_12, %c0_13] : memref<1x96xf32, #tpu.memory_space<vmem>>, vector<1x96xf32>
      %14 = vector.broadcast %13 : vector<1x96xf32> to vector<16x96xf32>
      %15 = arith.addf %12, %14 : vector<16x96xf32>
      %c0_14 = arith.constant 0 : index
      %c0_15 = arith.constant 0 : index
      %16 = vector.load %arg6[%c0_14, %c0_15] : memref<16x96xf32, #tpu.memory_space<vmem>>, vector<16x96xf32>
      tpu.vector_store %arg6[%c0_14, %c0_15], %15 {strides = array<i32>} : memref<16x96xf32, #tpu.memory_space<vmem>>, vector<16x96xf32>,
    } else {
    }
    return
  }
  func.func @transform_0(%arg0: i32, %arg1: i32, %arg2: i32) -> (i32, i32) {
    %c0_i32 = arith.constant 0 : i32
    return %arg0, %arg2 : i32, i32
  }
  func.func @transform_1(%arg0: i32, %arg1: i32, %arg2: i32) -> (i32, i32) {
    %c0_i32 = arith.constant 0 : i32
    return %arg2, %arg1 : i32, i32
  }
  func.func @transform_2(%arg0: i32, %arg1: i32, %arg2: i32) -> (i32, i32) {
    %c0_i32 = arith.constant 0 : i32
    %c0_i32_0 = arith.constant 0 : i32
    return %c0_i32, %arg1 : i32, i32
  }
  func.func @transform_3(%arg0: i32, %arg1: i32, %arg2: i32) -> (i32, i32) {
    %c0_i32 = arith.constant 0 : i32
    return %arg0, %arg1 : i32, i32
  }
}

</mosaic_0001>

<llo_original>
// kernel: tpu_custom_call.1
$region0: #{tpu_custom_call.1}
  #allocation0 [shape = 'u32[]', space=smem, size = 0x4, offset = 0x4, fixed_abs, tag = 'smem constant byte address 0x4 - core index']
  #allocation1 [shape = 'u32[72,128]{1,0:T(1,128)}', space=vmem, size = 0x9000, scoped, tag = 'internal scratch']
  #allocation2 [shape = 'f32[16,96]{1,0:T(8,128)}', space=vmem, size = 0x2000, scoped, tag = 'scratch operand']
  %s0 = inlined_call_operand.hbm [shape: f32[16,32], index: 0, kind: input, shape index: {}]
  %s1 = inlined_call_operand.hbm [shape: f32[32,96], index: 1, kind: input, shape index: {}]
  %s2 = inlined_call_operand.vmem [shape: f32[1,96], index: 2, kind: input, shape index: {}]
  %s3 = inlined_call_operand.hbm [shape: f32[16,96], index: 3, kind: output, shape index: {}]
  %s4 = sld [smem:[#allocation0]]
  $region38: #{tpu_custom_call.1} parent=0
    _
  %s6 = ssub.s32 1, %s4
  %s7 = scalar_select 0, %s6, %s4
  $region1: #{tpu_custom_call.1} parent=0
    #allocation3 [shape = 'u8[8192]{0}', space=vmem, size = 0x2000, scoped, tag = 'input window, operand 0, single buffered']
    #allocation4 [shape = 's32[1]{0}', space=sflag, size = 0x4, scoped, tag = 'scoped memory for tpu_custom_call.1']
    #allocation5 [shape = 's32[1]{0}', space=sflag, size = 0x4, scoped, tag = 'scoped memory for tpu_custom_call.1']
    #allocation6 [shape = 'u8[16384]{0}', space=vmem, size = 0x4000, scoped, tag = 'input window, operand 1, single buffered']
    #allocation7 [shape = 's32[1]{0}', space=sflag, size = 0x4, scoped, tag = 'scoped memory for tpu_custom_call.1']
    #allocation8 [shape = 'u8[8192]{0}', space=vmem, size = 0x2000, scoped, tag = 'output window, operand 0, single buffered']
    %8 = vsyncpa [#allocation4], 0
    %9 = vsyncpa [#allocation7], 0
    %10 = vsyncpa [#allocation5], 0
    // Predicated region
    $region2: #{tpu_custom_call.1} parent=1 // pred_check
      _
    $region3: #{tpu_custom_call.1} parent=1 // pred_check_branch
      %12 = sbr.rel (0) target = $region5
    $region4: #{tpu_custom_call.1} parent=1 // pred_region
      %14 = vsyncadd [#allocation4], 0
      %s15 = sshll.u32 %s0, 4
      %s16 = int_to_ptr.hbm [resolvable:$true] %s15
      %s17 = sshll.u32 [#allocation3], 4
      %s18 = int_to_ptr.vmem [resolvable:$true] %s17
      %23 = dma.hbm_to_vmem [thread:$0]  %s16, 256, %s18, [#allocation4], 128, 128, 8
    $region5: #{tpu_custom_call.1} parent=1 // pred_fallthru
      _
    // Predicated region
    $region6: #{tpu_custom_call.1} parent=1 // pred_check
      _
    $region7: #{tpu_custom_call.1} parent=1 // pred_check_branch
      %25 = sbr.rel (0) target = $region9
    $region8: #{tpu_custom_call.1} parent=1 // pred_region
      %27 = vsyncadd [#allocation7], 0
      %s28 = sshll.u32 %s1, 4
      %s29 = int_to_ptr.hbm [resolvable:$true] %s28
      %s30 = sshll.u32 [#allocation6], 4
      %s31 = int_to_ptr.vmem [resolvable:$true] %s30
      %36 = dma.hbm_to_vmem [thread:$0]  %s29, 512, %s31, [#allocation7], 128, 128, 8
    $region9: #{tpu_custom_call.1} parent=1 // pred_fallthru
      _
    // Predicated region
    $region10: #{tpu_custom_call.1} parent=1 // pred_check
      _
    $region11: #{tpu_custom_call.1} parent=1 // pred_check_branch
      %38 = sbr.rel (0) target = $region13
    $region12: #{tpu_custom_call.1} parent=1 // pred_region
      _
    $region13: #{tpu_custom_call.1} parent=1 // pred_fallthru
      _
    // Predicated region
    $region14: #{tpu_custom_call.1} parent=1 // pred_check
      _
    $region15: #{tpu_custom_call.1} parent=1 // pred_check_branch
      %40 = sbr.rel (0) target = $region17
    $region16: #{tpu_custom_call.1} parent=1 // pred_region
      %42 = dma.done [#allocation4], 256
    $region17: #{tpu_custom_call.1} parent=1 // pred_fallthru
      _
    // Predicated region
    $region18: #{tpu_custom_call.1} parent=1 // pred_check
      _
    $region19: #{tpu_custom_call.1} parent=1 // pred_check_branch
      %44 = sbr.rel (0) target = $region21
    $region20: #{tpu_custom_call.1} parent=1 // pred_region
      %46 = dma.done [#allocation7], 512
    $region21: #{tpu_custom_call.1} parent=1 // pred_fallthru
      _
    %p47 = scmp.eq.s32.totalorder 0, 0
    // Predicated region
    $region22: #{tpu_custom_call.1} parent=1 // pred_check
      %p48 = pneg %p47
    $region23: #{tpu_custom_call.1} parent=1 // pred_check_branch
      %50 = sbr.rel (%p48) target = $region25
    $region24: #{tpu_custom_call.1} parent=1 // pred_region
      %vm51 = vcmask 785408
      %52 = vst.msk [vmem:[#allocation2] sm:$0xff] %vm51, 0.0
      %53 = vst.msk [vmem:[#allocation2 + $0x8] sm:$0xff] %vm51, 0.0
    $region25: #{tpu_custom_call.1} parent=1 // pred_fallthru
      _
    %v54 = vld [vmem:[#allocation2] sm:$0xff]
    %v55 = vld [vmem:[#allocation2 + $0x8] sm:$0xff]
    %v56 = vld [vmem:[#allocation3] sm:$0xff]
    %v57 = vld [vmem:[#allocation3 + $0x8] sm:$0xff]
    %v58 = vld [vmem:[#allocation6] sm:$0xff]
    %v59 = vld [vmem:[#allocation6 + $0x8] sm:$0xff]
    %v60 = vld [vmem:[#allocation6 + $0x10] sm:$0xff]
    %v61 = vld [vmem:[#allocation6 + $0x18] sm:$0xff]
    %vm62 = vcmask 261120
    %v64 = vsel %vm62, %v56, 0
    %v67 = vsel %vm62, %v57, 0
    %69 = vmatpush.msra.mxu0 0.0
    %70 = vmatpush.msra.mxu0 0.0
    %71 = vmatpush.msra.mxu0 0.0
    %72 = vmatpush.msra.mxu0 0.0
    %73 = vmatpush.msra.mxu0 0.0
    %74 = vmatpush.msra.mxu0 0.0
    %75 = vmatpush.msra.mxu0 0.0
    %76 = vmatpush.msra.mxu0 0.0
    %77 = vmatpush.msra.mxu0 0.0
    %78 = vmatpush.msra.mxu0 0.0
    %79 = vmatpush.msra.mxu0 0.0
    %80 = vmatpush.msra.mxu0 0.0
    %81 = vmatpush.msra.mxu0 %v61
    %82 = vmatpush.msra.mxu0 %v60
    %83 = vmatpush.msra.mxu0 %v59
    %84 = vmatpush.msra.mxu0 %v58
    %85 = vmatmul.f32.gmra.mxu0 %v64
    %v86 = vpop.f32.mrf.mxu0
    %v87 = vadd.f32 0.0, %v86
    %88 = vmatmul.f32.gmra.mxu0 %v67
    %v89 = vpop.f32.mrf.mxu0
    %v90 = vadd.f32 0.0, %v89
    %91 = vdwg.mxu0
    %v92 = vadd.f32 %v54, %v87
    %v93 = vadd.f32 %v55, %v90
    %vm94 = vcmask 785408
    %95 = vst.msk [vmem:[#allocation2] sm:$0xff] %vm94, %v92
    %96 = vst.msk [vmem:[#allocation2 + $0x8] sm:$0xff] %vm94, %v93
    // Predicated region
    $region26: #{tpu_custom_call.1} parent=1 // pred_check
      %p97 = pneg %p47
    $region27: #{tpu_custom_call.1} parent=1 // pred_check_branch
      %99 = sbr.rel (%p97) target = $region29
    $region28: #{tpu_custom_call.1} parent=1 // pred_region
      %v100 = vld [vmem:[#allocation2] sm:$0xff]
      %v101 = vld [vmem:[#allocation2 + $0x8] sm:$0xff]
      %v102 = vld [vmem:[%s2] sm:$0x1]
      %v104 = vperm.slane %v102, 0
      %v106 = vadd.f32 %v100, %v104
      %v107 = vadd.f32 %v101, %v104
      %108 = vst.msk [vmem:[#allocation8] sm:$0xff] %vm94, %v106
      %109 = vst.msk [vmem:[#allocation8 + $0x8] sm:$0xff] %vm94, %v107
    $region29: #{tpu_custom_call.1} parent=1 // pred_fallthru
      _
    // Predicated region
    $region30: #{tpu_custom_call.1} parent=1 // pred_check
      _
    $region31: #{tpu_custom_call.1} parent=1 // pred_check_branch
      %111 = sbr.rel (0) target = $region33
    $region32: #{tpu_custom_call.1} parent=1 // pred_region
      %113 = vsyncadd [#allocation5], 0
      %s114 = sshll.u32 [#allocation8], 4
      %s115 = int_to_ptr.vmem [resolvable:$true] %s114
      %s116 = sshll.u32 %s3, 4
      %s117 = int_to_ptr.hbm [resolvable:$true] %s116
      %122 = dma.vmem_to_hbm [thread:$0]  %s115, 256, %s117, [#allocation5], 128, 128, 8
    $region33: #{tpu_custom_call.1} parent=1 // pred_fallthru
      _
    // Predicated region
    $region34: #{tpu_custom_call.1} parent=1 // pred_check
      _
    $region35: #{tpu_custom_call.1} parent=1 // pred_check_branch
      %124 = sbr.rel (0) target = $region37
    $region36: #{tpu_custom_call.1} parent=1 // pred_region
      %126 = dma.done [#allocation5], 256
    $region37: #{tpu_custom_call.1} parent=1 // pred_fallthru
      _
    %127 = vsyncpa [#allocation4], 1
    %128 = vsyncpa [#allocation7], 1
    %129 = vsyncpa [#allocation5], 1

</llo_original>
